<compile_context>
chip_gen: v7x
topology: tpu7x:2x2x1
jax: 0.10.0
libtpu: 0.0.40
codegen_flags: <defaults>
</compile_context>

<pallas_src>
import functools

import numpy as np
import jax
import jax.numpy as jnp
from jax.experimental import pallas as pl
from jax.experimental.pallas import tpu as pltpu  # noqa: F401  (not needed at this size)


# ----------------------------------------------------------------------------
# Host-side (shape-only) precompute: exact f32 positional-encoding slab,
# laid out channels-in-sublanes / tokens-in-lanes: slab[c, h*W + w] = emb[h,w,c]
# ----------------------------------------------------------------------------
@functools.lru_cache(maxsize=None)
def _build_slab(channels, H, W, dtype_str):
    c_pe = int(np.ceil(channels / 2))
    inv_freq = 1.0 / (10000.0 ** (np.arange(0, c_pe, 2, dtype=np.float32)
                                  / np.float32(c_pe)))
    nf = inv_freq.shape[0]
    if 2 * nf != c_pe:
        # Same configurations the PyTorch module supports (it would raise a
        # shape-mismatch on the emb[:, :, :c_pe] = emb_x assignment otherwise).
        raise ValueError(f"unsupported channel count {channels} "
                         f"(ceil(channels/2)={c_pe} must be even)")

    pos_x = np.arange(H, dtype=np.float32)
    pos_y = np.arange(W, dtype=np.float32)
    sx = pos_x[:, None] * inv_freq[None, :]                      # (H, nf)
    sy = pos_y[:, None] * inv_freq[None, :]                      # (W, nf)
    emb_x = np.concatenate([np.sin(sx), np.cos(sx)], axis=-1)    # (H, c_pe)
    emb_y = np.concatenate([np.sin(sy), np.cos(sy)], axis=-1)    # (W, c_pe)

    emb = np.zeros((H, W, 2 * c_pe), dtype=np.float32)
    emb[:, :, :c_pe] = emb_x[:, None, :]          # function of h only
    emb[:, :, c_pe:2 * c_pe] = emb_y[None, :, :]  # function of w only

    # Truncate to the requested channel count, put channels on the sublane
    # axis and flattened (h, w) tokens on the lane axis.
    slab = emb[:, :, :channels].reshape(H * W, channels).T        # (C, H*W)
    return jnp.asarray(slab.astype(np.dtype(dtype_str)))


# ----------------------------------------------------------------------------
# Pallas kernel: broadcast the constant (C, N) slab over the batch and store
# it lane-dense as a (B*C, N) block (full sublanes, unmasked stores).
# ----------------------------------------------------------------------------
def pos_enc_kernel(slab_ref, o_ref):
    reps = o_ref.shape[0] // slab_ref.shape[0]   # = batch size (static)
    o_ref[...] = jnp.tile(slab_ref[...], (reps, 1))


# ----------------------------------------------------------------------------
# Wrapper (forward pass of PositionalEncodingPermute2D)
# ----------------------------------------------------------------------------
def positional_encoding_permute_2d(x):
    """x: (B, C, H, W) -> positional encoding of shape (B, C, H, W), x.dtype.

    Note: like the PyTorch module, only channel counts with even ceil(C/2)
    are supported (otherwise a ValueError is raised).
    """
    B, ch, H, W = x.shape
    N = H * W
    slab = _build_slab(ch, H, W, np.dtype(x.dtype).str)           # (C, N)

    out_flat = pl.pallas_call(
        pos_enc_kernel,
        out_shape=jax.ShapeDtypeStruct((B * ch, N), x.dtype),
        grid=(1,),                                                # single step
        in_specs=[pl.BlockSpec((ch, N), lambda i: (0, 0))],
        out_specs=pl.BlockSpec((B * ch, N), lambda i: (0, 0)),
    )(slab)

    # (B*C, N) -> (B, C, H, W): leading/trailing-dim split, no data movement.
    return out_flat.reshape(B, ch, H, W)


# ----------------------------------------------------------------------------
# Pure-numpy reference mirroring the PyTorch module (for the in-script check)
# ----------------------------------------------------------------------------
def positional_encoding_permute_2d_ref(x):
    x_np = np.asarray(x)
    B, ch, H, W = x_np.shape
    c_pe = int(np.ceil(ch / 2))
    inv_freq = 1.0 / (10000.0 ** (np.arange(0, c_pe, 2, dtype=np.float32)
                                  / np.float32(c_pe)))
    pos_x = np.arange(H, dtype=np.float32)
    pos_y = np.arange(W, dtype=np.float32)
    sx = np.einsum("i,j->ij", pos_x, inv_freq)
    sy = np.einsum("i,j->ij", pos_y, inv_freq)
    emb_x = np.concatenate([np.sin(sx), np.cos(sx)], axis=-1)[:, None, :]  # (H,1,c_pe)
    emb_y = np.concatenate([np.sin(sy), np.cos(sy)], axis=-1)              # (W,c_pe)
    emb = np.zeros((H, W, 2 * c_pe), dtype=np.float32)
    emb[:, :, :c_pe] = emb_x
    emb[:, :, c_pe:2 * c_pe] = emb_y
    out = np.broadcast_to(emb[None, :, :, :ch], (B, H, W, ch))
    return np.transpose(out, (0, 3, 1, 2)).astype(x_np.dtype)


if __name__ == "__main__":
    B, ch, H, W = 2, 4, 16, 16

    key = jax.random.PRNGKey(0)
    x = jax.random.normal(key, (B, ch, H, W), jnp.float32)

    out = positional_encoding_permute_2d(x)
    jax.block_until_ready(out)

    ref = positional_encoding_permute_2d_ref(x)
    assert out.shape == (B, ch, H, W)
    # Kernel is a pure copy/broadcast of the exactly-precomputed f32 slab, so
    # the result should match the reference to float32 exactness.
    np.testing.assert_allclose(np.asarray(out), ref, rtol=0.0, atol=1e-6)

    print("KERNEL_OK")
</pallas_src>

<mosaic_0001>
module attributes {stable_mosaic.version = 11 : i64} {
  func.func @pos_enc_kernel(%arg0: i32, %arg1: memref<4x256xf32, #tpu.memory_space<vmem>>, %arg2: memref<8x256xf32, #tpu.memory_space<vmem>>) attributes {dimension_semantics = [#tpu.dimension_semantics<arbitrary>], iteration_bounds = array<i64: 1>, scalar_prefetch = 0 : i64, scratch_operands = 0 : i64, tpu.core_type = #tpu.core_type<tc>, window_params = [{pipeline_mode = #tpu.pipeline_mode<synchronous>, transform_indices = @transform_0, window_bounds = array<i64: 4, 256>}, {pipeline_mode = #tpu.pipeline_mode<synchronous>, transform_indices = @transform_1, window_bounds = array<i64: 8, 256>}]} {
    %c0 = arith.constant 0 : index
    %c0_0 = arith.constant 0 : index
    %0 = vector.load %arg1[%c0, %c0_0] : memref<4x256xf32, #tpu.memory_space<vmem>>, vector<4x256xf32>
    %1 = tpu.concatenate %0, %0 in 0 : vector<4x256xf32>, vector<4x256xf32> -> vector<8x256xf32>
    %c0_1 = arith.constant 0 : index
    %c0_2 = arith.constant 0 : index
    %2 = vector.load %arg2[%c0_1, %c0_2] : memref<8x256xf32, #tpu.memory_space<vmem>>, vector<8x256xf32>
    tpu.vector_store %arg2[%c0_1, %c0_2], %1 {strides = array<i32>} : memref<8x256xf32, #tpu.memory_space<vmem>>, vector<8x256xf32>,
    return
  }
  func.func @transform_0(%arg0: i32) -> (i32, i32) {
    %c0_i32 = arith.constant 0 : i32
    %c0_i32_0 = arith.constant 0 : i32
    %c0_i32_1 = arith.constant 0 : i32
    return %c0_i32, %c0_i32_0 : i32, i32
  }
  func.func @transform_1(%arg0: i32) -> (i32, i32) {
    %c0_i32 = arith.constant 0 : i32
    %c0_i32_0 = arith.constant 0 : i32
    %c0_i32_1 = arith.constant 0 : i32
    return %c0_i32, %c0_i32_0 : i32, i32
  }
}

</mosaic_0001>

<llo_original>
// kernel: tpu_custom_call.1
$region0: #{tpu_custom_call.1}
  #allocation0 [shape = 'u32[]', space=smem, size = 0x4, offset = 0x4, fixed_abs, tag = 'smem constant byte address 0x4 - core index']
  #allocation1 [shape = 'u32[144,128]{1,0:T(1,128)}', space=vmem, size = 0x12000, scoped, tag = 'internal scratch']
  %s0 = inlined_call_operand.hbm [shape: f32[4,256], index: 0, kind: input, shape index: {}]
  %s1 = inlined_call_operand.hbm [shape: f32[8,256], index: 1, kind: output, shape index: {}]
  %s2 = sld [smem:[#allocation0]]
  $region18: #{tpu_custom_call.1} parent=0
    _
  %s4 = ssub.s32 1, %s2
  %s5 = scalar_select 0, %s4, %s2
  $region1: #{tpu_custom_call.1} parent=0
    #allocation2 [shape = 'u8[4096]{0}', space=vmem, size = 0x1000, scoped, tag = 'input window, operand 0, single buffered']
    #allocation3 [shape = 's32[1]{0}', space=sflag, size = 0x4, scoped, tag = 'scoped memory for tpu_custom_call.1']
    #allocation4 [shape = 's32[1]{0}', space=sflag, size = 0x4, scoped, tag = 'scoped memory for tpu_custom_call.1']
    #allocation5 [shape = 'u8[8192]{0}', space=vmem, size = 0x2000, scoped, tag = 'output window, operand 0, single buffered']
    %6 = vsyncpa [#allocation3], 0
    %7 = vsyncpa [#allocation4], 0
    // Predicated region
    $region2: #{tpu_custom_call.1} parent=1 // pred_check
      _
    $region3: #{tpu_custom_call.1} parent=1 // pred_check_branch
      %9 = sbr.rel (0) target = $region5
    $region4: #{tpu_custom_call.1} parent=1 // pred_region
      %s11 = ssub.s32 128, 128
      %12 = vsyncadd [#allocation3], %s11
      %s14 = sshll.u32 [#allocation2], 4
      %s15 = int_to_ptr.vmem [resolvable:$true] %s14
      %17 = dma.hbm_to_vmem [thread:$0]  %s0, 128, %s15, [#allocation3]
    $region5: #{tpu_custom_call.1} parent=1 // pred_fallthru
      _
    // Predicated region
    $region6: #{tpu_custom_call.1} parent=1 // pred_check
      _
    $region7: #{tpu_custom_call.1} parent=1 // pred_check_branch
      %19 = sbr.rel (0) target = $region9
    $region8: #{tpu_custom_call.1} parent=1 // pred_region
      %20 = dma.done [#allocation3], 128
    $region9: #{tpu_custom_call.1} parent=1 // pred_fallthru
      _
    %v21 = vld [vmem:[#allocation2] sm:$0xff]
    %v23 = vcombine.high %v21, %v21
    %v25 = vcombine.low %v21, %v21
    %vm27 = vcmask 1043456
    %v28 = vsel %vm27, %v21, %v25
    %v29 = vsel %vm27, %v23, %v21
    %30 = vst [vmem:[#allocation5] sm:$0xff] %v28
    %31 = vst [vmem:[#allocation5 + $0x8] sm:$0xff] %v29
    // Predicated region
    $region10: #{tpu_custom_call.1} parent=1 // pred_check
      _
    $region11: #{tpu_custom_call.1} parent=1 // pred_check_branch
      %33 = sbr.rel (0) target = $region13
    $region12: #{tpu_custom_call.1} parent=1 // pred_region
      %s35 = ssub.s32 256, 256
      %36 = vsyncadd [#allocation4], %s35
      %s38 = sshll.u32 [#allocation5], 4
      %s39 = int_to_ptr.vmem [resolvable:$true] %s38
      %41 = dma.vmem_to_hbm [thread:$0]  %s39, 256, %s1, [#allocation4]
    $region13: #{tpu_custom_call.1} parent=1 // pred_fallthru
      _
    // Predicated region
    $region14: #{tpu_custom_call.1} parent=1 // pred_check
      _
    $region15: #{tpu_custom_call.1} parent=1 // pred_check_branch
      %43 = sbr.rel (0) target = $region17
    $region16: #{tpu_custom_call.1} parent=1 // pred_region
      %44 = dma.done [#allocation4], 256
    $region17: #{tpu_custom_call.1} parent=1 // pred_fallthru
      _
    %45 = vsyncpa [#allocation3], 1
    %46 = vsyncpa [#allocation4], 1

</llo_original>
